<compile_context>
chip_gen: v6e
topology: v6e:2x2x1
jax: 0.10.0
libtpu: 0.0.40
codegen_flags: <defaults>
</compile_context>

<pallas_src>
import jax
import jax.numpy as jnp
from jax.experimental import pallas as pl
from jax.experimental.pallas import tpu as pltpu


OUT_PAD = 128  # pad output features to one full lane width (unmasked vst)


def _score_mlp_kernel(x_ref, t_ref,
                      w1x_ref, w1t_ref, b1_ref,
                      w2_ref, b2_ref,
                      w3_ref, b3_ref,
                      w4_ref, b4_ref,
                      o_ref):
    """Fused 4-layer MLP for one (TILE_M, .) row tile.

    Layer 1 folds the time channel instead of a feature concat:
        h1 = x @ W1[:F] + t * W1[F] + b1
    All matmuls use bf16 operands with f32 accumulation on the MXU.
    """
    x = x_ref[...]                       # (TM, F)  bf16
    t = t_ref[...]                       # (TM, 1)  f32

    h = jnp.dot(x, w1x_ref[...], preferred_element_type=jnp.float32)
    h = h + t * w1t_ref[...] + b1_ref[...]
    h = jnp.maximum(h, 0.0)

    h = jnp.dot(h.astype(jnp.bfloat16), w2_ref[...],
                preferred_element_type=jnp.float32) + b2_ref[...]
    h = jnp.maximum(h, 0.0)

    h = jnp.dot(h.astype(jnp.bfloat16), w3_ref[...],
                preferred_element_type=jnp.float32) + b3_ref[...]
    h = jnp.maximum(h, 0.0)

    out = jnp.dot(h.astype(jnp.bfloat16), w4_ref[...],
                  preferred_element_type=jnp.float32) + b4_ref[...]
    o_ref[...] = out                     # (TM, OUT_PAD) f32, lane-dense store


def score_network_forward(x, t, params, *, seq_len=24):
    """Reproduces ScoreNetwork.forward(x, t).

    x : (batch, 24, input_dim) float32
    t : (batch,) int or float
    params : dict with w1..w4 of shape (in, out) and b1..b4 of shape (out,)
    returns (batch, 24, output_dim) float32
    """
    batch, seq, feat = x.shape
    assert seq == seq_len, "PyTorch module hard-codes expand(-1, 24, 1)"
    rows = batch * seq_len

    # --- time channel as a (rows, 1) column; no concat / second copy of x ---
    t_col = (t.astype(jnp.float32) / 1000.0)[:, None]                 # (B, 1)
    t_col = jnp.broadcast_to(t_col, (batch, seq_len)).reshape(rows, 1)
    x_flat = x.reshape(rows, feat).astype(jnp.bfloat16)

    # --- weights: split W1's t-row, bf16 operands, pad W4/b4 to 128 lanes ---
    w1, b1 = params["w1"], params["b1"]
    hidden_dim = w1.shape[1]
    output_dim = params["w4"].shape[1]

    w1x = w1[:feat].astype(jnp.bfloat16)                 # (F, H)
    w1t = w1[feat:feat + 1].astype(jnp.float32)          # (1, H)
    b1_2d = b1.reshape(1, -1).astype(jnp.float32)

    w2 = params["w2"].astype(jnp.bfloat16)
    b2_2d = params["b2"].reshape(1, -1).astype(jnp.float32)
    w3 = params["w3"].astype(jnp.bfloat16)
    b3_2d = params["b3"].reshape(1, -1).astype(jnp.float32)

    w4p = jnp.zeros((hidden_dim, OUT_PAD), jnp.bfloat16)
    w4p = w4p.at[:, :output_dim].set(params["w4"].astype(jnp.bfloat16))
    b4p = jnp.zeros((1, OUT_PAD), jnp.float32)
    b4p = b4p.at[:, :output_dim].set(params["b4"].astype(jnp.float32))

    # --- row tiling (rows = batch*24 is always a multiple of 8) ---
    tile_m = min(256, rows)
    num_tiles = pl.cdiv(rows, tile_m)
    rows_pad = num_tiles * tile_m
    if rows_pad != rows:
        x_flat = jnp.pad(x_flat, ((0, rows_pad - rows), (0, 0)))
        t_col = jnp.pad(t_col, ((0, rows_pad - rows), (0, 0)))

    def row_spec(width):
        return pl.BlockSpec((tile_m, width), lambda i: (i, 0))

    def const_spec(arr):
        return pl.BlockSpec(arr.shape, lambda i: (0, 0))

    flops = 2 * rows_pad * (feat * hidden_dim
                            + 2 * hidden_dim * hidden_dim
                            + hidden_dim * OUT_PAD)
    bytes_accessed = (x_flat.size * 2 + t_col.size * 4
                      + rows_pad * OUT_PAD * 4
                      + (w1x.size + w2.size + w3.size + w4p.size) * 2
                      + (w1t.size + b1_2d.size + b2_2d.size
                         + b3_2d.size + b4p.size) * 4)

    out_flat = pl.pallas_call(
        _score_mlp_kernel,
        out_shape=jax.ShapeDtypeStruct((rows_pad, OUT_PAD), jnp.float32),
        grid=(num_tiles,),
        in_specs=[
            row_spec(feat), row_spec(1),
            const_spec(w1x), const_spec(w1t), const_spec(b1_2d),
            const_spec(w2), const_spec(b2_2d),
            const_spec(w3), const_spec(b3_2d),
            const_spec(w4p), const_spec(b4p),
        ],
        out_specs=row_spec(OUT_PAD),
        compiler_params=pltpu.CompilerParams(
            dimension_semantics=("parallel",),
            vmem_limit_bytes=32 << 20),
        cost_estimate=pl.CostEstimate(
            flops=flops, transcendentals=0, bytes_accessed=bytes_accessed),
    )(x_flat, t_col, w1x, w1t, b1_2d, w2, b2_2d, w3, b3_2d, w4p, b4p)

    return out_flat[:rows, :output_dim].reshape(batch, seq_len, output_dim)


def init_params(key, input_dim=4, hidden_dim=256, output_dim=3):
    """Deterministic init mirroring nn.Linear's U(-1/sqrt(fan_in), 1/sqrt(fan_in))."""
    dims = [(input_dim + 1, hidden_dim),
            (hidden_dim, hidden_dim),
            (hidden_dim, hidden_dim),
            (hidden_dim, output_dim)]
    params = {}
    for i, (fan_in, fan_out) in enumerate(dims, start=1):
        key, kw, kb = jax.random.split(key, 3)
        bound = 1.0 / (fan_in ** 0.5)
        params[f"w{i}"] = jax.random.uniform(
            kw, (fan_in, fan_out), jnp.float32, -bound, bound)
        params[f"b{i}"] = jax.random.uniform(
            kb, (fan_out,), jnp.float32, -bound, bound)
    return params


def _reference_f32(x, t, params, seq_len=24):
    """Pure-JAX f32 reference matching the original PyTorch forward."""
    batch = x.shape[0]
    t_col = (t.astype(jnp.float32) / 1000.0)[:, None, None]
    t_col = jnp.broadcast_to(t_col, (batch, seq_len, 1))
    h = jnp.concatenate([x, t_col], axis=-1).reshape(batch * seq_len, -1)
    h = jnp.maximum(h @ params["w1"] + params["b1"], 0.0)
    h = jnp.maximum(h @ params["w2"] + params["b2"], 0.0)
    h = jnp.maximum(h @ params["w3"] + params["b3"], 0.0)
    h = h @ params["w4"] + params["b4"]
    return h.reshape(batch, seq_len, -1)


def _reference_bf16(x, t, params, seq_len=24):
    """Pure-JAX reference mimicking the kernel's bf16-operand / f32-accum math."""
    batch, _, feat = x.shape
    t_col = (t.astype(jnp.float32) / 1000.0)[:, None]
    t_col = jnp.broadcast_to(t_col, (batch, seq_len)).reshape(-1, 1)
    xf = x.reshape(batch * seq_len, feat)
    bf = lambda a: a.astype(jnp.bfloat16).astype(jnp.float32)
    w1 = params["w1"]
    h = bf(xf) @ bf(w1[:feat]) + t_col * w1[feat:feat + 1] + params["b1"][None]
    h = jnp.maximum(h, 0.0)
    h = jnp.maximum(bf(h) @ bf(params["w2"]) + params["b2"][None], 0.0)
    h = jnp.maximum(bf(h) @ bf(params["w3"]) + params["b3"][None], 0.0)
    h = bf(h) @ bf(params["w4"]) + params["b4"][None]
    return h.reshape(batch, seq_len, -1)


if __name__ == "__main__":
    key = jax.random.PRNGKey(0)
    k_params, k_x, k_t = jax.random.split(key, 3)

    batch, seq_len, input_dim, hidden_dim, output_dim = 2, 24, 4, 256, 3
    params = init_params(k_params, input_dim, hidden_dim, output_dim)

    x = jax.random.normal(k_x, (batch, seq_len, input_dim), jnp.float32)
    t = jax.random.randint(k_t, (batch,), 0, 1000)  # diffusion timestep

    out = jax.block_until_ready(
        score_network_forward(x, t, params, seq_len=seq_len))

    assert out.shape == (batch, seq_len, output_dim), out.shape

    ref_bf16 = _reference_bf16(x, t, params, seq_len=seq_len)
    assert jnp.allclose(out, ref_bf16, atol=2e-3, rtol=2e-3), \
        "mismatch vs bf16-precision reference"

    ref_f32 = _reference_f32(x, t, params, seq_len=seq_len)
    assert jnp.allclose(out, ref_f32, atol=1e-1, rtol=1e-1), \
        "mismatch vs f32 reference"

    print("KERNEL_OK")
</pallas_src>

<mosaic_0001>
module attributes {stable_mosaic.version = 11 : i64} {
  func.func @_score_mlp_kernel(%arg0: i32, %arg1: memref<48x4xbf16, #tpu.memory_space<vmem>>, %arg2: memref<48x1xf32, #tpu.memory_space<vmem>>, %arg3: memref<4x256xbf16, #tpu.memory_space<vmem>>, %arg4: memref<1x256xf32, #tpu.memory_space<vmem>>, %arg5: memref<1x256xf32, #tpu.memory_space<vmem>>, %arg6: memref<256x256xbf16, #tpu.memory_space<vmem>>, %arg7: memref<1x256xf32, #tpu.memory_space<vmem>>, %arg8: memref<256x256xbf16, #tpu.memory_space<vmem>>, %arg9: memref<1x256xf32, #tpu.memory_space<vmem>>, %arg10: memref<256x128xbf16, #tpu.memory_space<vmem>>, %arg11: memref<1x128xf32, #tpu.memory_space<vmem>>, %arg12: memref<48x128xf32, #tpu.memory_space<vmem>>) attributes {dimension_semantics = [#tpu.dimension_semantics<parallel>], iteration_bounds = array<i64: 1>, scalar_prefetch = 0 : i64, scratch_operands = 0 : i64, tpu.core_type = #tpu.core_type<tc>, window_params = [{transform_indices = @transform_0, window_bounds = array<i64: 48, 4>}, {transform_indices = @transform_1, window_bounds = array<i64: 48, 1>}, {pipeline_mode = #tpu.pipeline_mode<synchronous>, transform_indices = @transform_2, window_bounds = array<i64: 4, 256>}, {pipeline_mode = #tpu.pipeline_mode<synchronous>, transform_indices = @transform_3, window_bounds = array<i64: 1, 256>}, {pipeline_mode = #tpu.pipeline_mode<synchronous>, transform_indices = @transform_4, window_bounds = array<i64: 1, 256>}, {pipeline_mode = #tpu.pipeline_mode<synchronous>, transform_indices = @transform_5, window_bounds = array<i64: 256, 256>}, {pipeline_mode = #tpu.pipeline_mode<synchronous>, transform_indices = @transform_6, window_bounds = array<i64: 1, 256>}, {pipeline_mode = #tpu.pipeline_mode<synchronous>, transform_indices = @transform_7, window_bounds = array<i64: 256, 256>}, {pipeline_mode = #tpu.pipeline_mode<synchronous>, transform_indices = @transform_8, window_bounds = array<i64: 1, 256>}, {pipeline_mode = #tpu.pipeline_mode<synchronous>, transform_indices = @transform_9, window_bounds = array<i64: 256, 128>}, {pipeline_mode = #tpu.pipeline_mode<synchronous>, transform_indices = @transform_10, window_bounds = array<i64: 1, 128>}, {transform_indices = @transform_11, window_bounds = array<i64: 48, 128>}]} {
    %c0 = arith.constant 0 : index
    %c0_0 = arith.constant 0 : index
    %0 = vector.load %arg1[%c0, %c0_0] : memref<48x4xbf16, #tpu.memory_space<vmem>>, vector<48x4xbf16>
    %c0_1 = arith.constant 0 : index
    %c0_2 = arith.constant 0 : index
    %1 = vector.load %arg2[%c0_1, %c0_2] : memref<48x1xf32, #tpu.memory_space<vmem>>, vector<48x1xf32>
    %c0_3 = arith.constant 0 : index
    %c0_4 = arith.constant 0 : index
    %2 = vector.load %arg3[%c0_3, %c0_4] : memref<4x256xbf16, #tpu.memory_space<vmem>>, vector<4x256xbf16>
    %cst = arith.constant dense<0.000000e+00> : vector<48x256xf32>
    %3 = tpu.matmul %0, %2, %cst {dimension_numbers = #tpu.dot_dimension_numbers<[1], [0], [0], [1], [0, 0, 1, 1], [], []>} : vector<48x4xbf16>, vector<4x256xbf16>, vector<48x256xf32> -> vector<48x256xf32>
    %c0_5 = arith.constant 0 : index
    %c0_6 = arith.constant 0 : index
    %4 = vector.load %arg4[%c0_5, %c0_6] : memref<1x256xf32, #tpu.memory_space<vmem>>, vector<1x256xf32>
    %5 = vector.broadcast %1 : vector<48x1xf32> to vector<48x256xf32>
    %6 = vector.broadcast %4 : vector<1x256xf32> to vector<48x256xf32>
    %7 = arith.mulf %5, %6 : vector<48x256xf32>
    %8 = arith.addf %3, %7 : vector<48x256xf32>
    %c0_7 = arith.constant 0 : index
    %c0_8 = arith.constant 0 : index
    %9 = vector.load %arg5[%c0_7, %c0_8] : memref<1x256xf32, #tpu.memory_space<vmem>>, vector<1x256xf32>
    %10 = vector.broadcast %9 : vector<1x256xf32> to vector<48x256xf32>
    %11 = arith.addf %8, %10 : vector<48x256xf32>
    %cst_9 = arith.constant 0.000000e+00 : f32
    %12 = vector.broadcast %cst_9 : f32 to vector<48x256xf32>
    %13 = arith.maximumf %11, %12 : vector<48x256xf32>
    %14 = arith.truncf %13 : vector<48x256xf32> to vector<48x256xbf16>
    %c0_10 = arith.constant 0 : index
    %c0_11 = arith.constant 0 : index
    %15 = vector.load %arg6[%c0_10, %c0_11] : memref<256x256xbf16, #tpu.memory_space<vmem>>, vector<256x256xbf16>
    %cst_12 = arith.constant dense<0.000000e+00> : vector<48x256xf32>
    %16 = tpu.matmul %14, %15, %cst_12 {dimension_numbers = #tpu.dot_dimension_numbers<[1], [0], [0], [1], [0, 0, 1, 1], [], []>} : vector<48x256xbf16>, vector<256x256xbf16>, vector<48x256xf32> -> vector<48x256xf32>
    %c0_13 = arith.constant 0 : index
    %c0_14 = arith.constant 0 : index
    %17 = vector.load %arg7[%c0_13, %c0_14] : memref<1x256xf32, #tpu.memory_space<vmem>>, vector<1x256xf32>
    %18 = vector.broadcast %17 : vector<1x256xf32> to vector<48x256xf32>
    %19 = arith.addf %16, %18 : vector<48x256xf32>
    %cst_15 = arith.constant 0.000000e+00 : f32
    %20 = vector.broadcast %cst_15 : f32 to vector<48x256xf32>
    %21 = arith.maximumf %19, %20 : vector<48x256xf32>
    %22 = arith.truncf %21 : vector<48x256xf32> to vector<48x256xbf16>
    %c0_16 = arith.constant 0 : index
    %c0_17 = arith.constant 0 : index
    %23 = vector.load %arg8[%c0_16, %c0_17] : memref<256x256xbf16, #tpu.memory_space<vmem>>, vector<256x256xbf16>
    %cst_18 = arith.constant dense<0.000000e+00> : vector<48x256xf32>
    %24 = tpu.matmul %22, %23, %cst_18 {dimension_numbers = #tpu.dot_dimension_numbers<[1], [0], [0], [1], [0, 0, 1, 1], [], []>} : vector<48x256xbf16>, vector<256x256xbf16>, vector<48x256xf32> -> vector<48x256xf32>
    %c0_19 = arith.constant 0 : index
    %c0_20 = arith.constant 0 : index
    %25 = vector.load %arg9[%c0_19, %c0_20] : memref<1x256xf32, #tpu.memory_space<vmem>>, vector<1x256xf32>
    %26 = vector.broadcast %25 : vector<1x256xf32> to vector<48x256xf32>
    %27 = arith.addf %24, %26 : vector<48x256xf32>
    %cst_21 = arith.constant 0.000000e+00 : f32
    %28 = vector.broadcast %cst_21 : f32 to vector<48x256xf32>
    %29 = arith.maximumf %27, %28 : vector<48x256xf32>
    %30 = arith.truncf %29 : vector<48x256xf32> to vector<48x256xbf16>
    %c0_22 = arith.constant 0 : index
    %c0_23 = arith.constant 0 : index
    %31 = vector.load %arg10[%c0_22, %c0_23] : memref<256x128xbf16, #tpu.memory_space<vmem>>, vector<256x128xbf16>
    %cst_24 = arith.constant dense<0.000000e+00> : vector<48x128xf32>
    %32 = tpu.matmul %30, %31, %cst_24 {dimension_numbers = #tpu.dot_dimension_numbers<[1], [0], [0], [1], [0, 0, 1, 1], [], []>} : vector<48x256xbf16>, vector<256x128xbf16>, vector<48x128xf32> -> vector<48x128xf32>
    %c0_25 = arith.constant 0 : index
    %c0_26 = arith.constant 0 : index
    %33 = vector.load %arg11[%c0_25, %c0_26] : memref<1x128xf32, #tpu.memory_space<vmem>>, vector<1x128xf32>
    %34 = vector.broadcast %33 : vector<1x128xf32> to vector<48x128xf32>
    %35 = arith.addf %32, %34 : vector<48x128xf32>
    %c0_27 = arith.constant 0 : index
    %c0_28 = arith.constant 0 : index
    %36 = vector.load %arg12[%c0_27, %c0_28] : memref<48x128xf32, #tpu.memory_space<vmem>>, vector<48x128xf32>
    tpu.vector_store %arg12[%c0_27, %c0_28], %35 {strides = array<i32>} : memref<48x128xf32, #tpu.memory_space<vmem>>, vector<48x128xf32>,
    return
  }
  func.func @transform_0(%arg0: i32) -> (i32, i32) {
    %c0_i32 = arith.constant 0 : i32
    %c0_i32_0 = arith.constant 0 : i32
    return %arg0, %c0_i32 : i32, i32
  }
  func.func @transform_1(%arg0: i32) -> (i32, i32) {
    %c0_i32 = arith.constant 0 : i32
    %c0_i32_0 = arith.constant 0 : i32
    return %arg0, %c0_i32 : i32, i32
  }
  func.func @transform_2(%arg0: i32) -> (i32, i32) {
    %c0_i32 = arith.constant 0 : i32
    %c0_i32_0 = arith.constant 0 : i32
    %c0_i32_1 = arith.constant 0 : i32
    return %c0_i32, %c0_i32_0 : i32, i32
  }
  func.func @transform_3(%arg0: i32) -> (i32, i32) {
    %c0_i32 = arith.constant 0 : i32
    %c0_i32_0 = arith.constant 0 : i32
    %c0_i32_1 = arith.constant 0 : i32
    return %c0_i32, %c0_i32_0 : i32, i32
  }
  func.func @transform_4(%arg0: i32) -> (i32, i32) {
    %c0_i32 = arith.constant 0 : i32
    %c0_i32_0 = arith.constant 0 : i32
    %c0_i32_1 = arith.constant 0 : i32
    return %c0_i32, %c0_i32_0 : i32, i32
  }
  func.func @transform_5(%arg0: i32) -> (i32, i32) {
    %c0_i32 = arith.constant 0 : i32
    %c0_i32_0 = arith.constant 0 : i32
    %c0_i32_1 = arith.constant 0 : i32
    return %c0_i32, %c0_i32_0 : i32, i32
  }
  func.func @transform_6(%arg0: i32) -> (i32, i32) {
    %c0_i32 = arith.constant 0 : i32
    %c0_i32_0 = arith.constant 0 : i32
    %c0_i32_1 = arith.constant 0 : i32
    return %c0_i32, %c0_i32_0 : i32, i32
  }
  func.func @transform_7(%arg0: i32) -> (i32, i32) {
    %c0_i32 = arith.constant 0 : i32
    %c0_i32_0 = arith.constant 0 : i32
    %c0_i32_1 = arith.constant 0 : i32
    return %c0_i32, %c0_i32_0 : i32, i32
  }
  func.func @transform_8(%arg0: i32) -> (i32, i32) {
    %c0_i32 = arith.constant 0 : i32
    %c0_i32_0 = arith.constant 0 : i32
    %c0_i32_1 = arith.constant 0 : i32
    return %c0_i32, %c0_i32_0 : i32, i32
  }
  func.func @transform_9(%arg0: i32) -> (i32, i32) {
    %c0_i32 = arith.constant 0 : i32
    %c0_i32_0 = arith.constant 0 : i32
    %c0_i32_1 = arith.constant 0 : i32
    return %c0_i32, %c0_i32_0 : i32, i32
  }
  func.func @transform_10(%arg0: i32) -> (i32, i32) {
    %c0_i32 = arith.constant 0 : i32
    %c0_i32_0 = arith.constant 0 : i32
    %c0_i32_1 = arith.constant 0 : i32
    return %c0_i32, %c0_i32_0 : i32, i32
  }
  func.func @transform_11(%arg0: i32) -> (i32, i32) {
    %c0_i32 = arith.constant 0 : i32
    %c0_i32_0 = arith.constant 0 : i32
    return %arg0, %c0_i32 : i32, i32
  }
}

</mosaic_0001>

<llo_original>
// kernel: tpu_custom_call.1
$region0: #{tpu_custom_call.1}
  #allocation0 [shape = 'u32[]', space=smem, size = 0x4, offset = 0x4, fixed_abs, tag = 'smem constant byte address 0x4 - core index']
  #allocation1 [shape = 'u32[144,128]{1,0:T(1,128)}', space=vmem, size = 0x12000, scoped, tag = 'internal scratch']
  %s0 = inlined_call_operand.vmem [shape: bf16[48,4], index: 0, kind: input, shape index: {}]
  %s1 = inlined_call_operand.vmem [shape: f32[48,1], index: 1, kind: input, shape index: {}]
  %s2 = inlined_call_operand.vmem [shape: bf16[4,256], index: 2, kind: input, shape index: {}]
  %s3 = inlined_call_operand.vmem [shape: f32[1,256], index: 3, kind: input, shape index: {}]
  %s4 = inlined_call_operand.vmem [shape: f32[1,256], index: 4, kind: input, shape index: {}]
  %s5 = inlined_call_operand.hbm [shape: bf16[256,256], index: 5, kind: input, shape index: {}]
  %s6 = inlined_call_operand.vmem [shape: f32[1,256], index: 6, kind: input, shape index: {}]
  %s7 = inlined_call_operand.hbm [shape: bf16[256,256], index: 7, kind: input, shape index: {}]
  %s8 = inlined_call_operand.vmem [shape: f32[1,256], index: 8, kind: input, shape index: {}]
  %s9 = inlined_call_operand.hbm [shape: bf16[256,128], index: 9, kind: input, shape index: {}]
  %s10 = inlined_call_operand.vmem [shape: f32[1,128], index: 10, kind: input, shape index: {}]
  %s11 = inlined_call_operand.hbm [shape: f32[48,128], index: 11, kind: output, shape index: {}]
  %s12 = sld [smem:[#allocation0]]
  $region66: #{tpu_custom_call.1} parent=0
    _
  %s14 = ssub.s32 1, %s12
  %s15 = scalar_select 0, %s14, %s12
  $region1: #{tpu_custom_call.1} parent=0
    #allocation2 [shape = 'u8[131072]{0}', space=vmem, size = 0x20000, scoped, tag = 'input window, operand 5, single buffered']
    #allocation3 [shape = 's32[1]{0}', space=sflag, size = 0x4, scoped, tag = 'scoped memory for tpu_custom_call.1']
    #allocation4 [shape = 's32[1]{0}', space=sflag, size = 0x4, scoped, tag = 'scoped memory for tpu_custom_call.1']
    #allocation5 [shape = 'u8[131072]{0}', space=vmem, size = 0x20000, scoped, tag = 'input window, operand 7, single buffered']
    #allocation6 [shape = 's32[1]{0}', space=sflag, size = 0x4, scoped, tag = 'scoped memory for tpu_custom_call.1']
    #allocation7 [shape = 'u8[65536]{0}', space=vmem, size = 0x10000, scoped, tag = 'input window, operand 9, single buffered']
    #allocation8 [shape = 'u8[24576]{0}', space=vmem, size = 0x6000, scoped, tag = 'output window, operand 0, single buffered']
    %16 = vsyncpa [#allocation3], 0
    %17 = vsyncpa [#allocation6], 0
    %18 = vsyncpa [#allocation4], 0
    // Predicated region
    $region2: #{tpu_custom_call.1} parent=1 // pred_check
      _
    $region3: #{tpu_custom_call.1} parent=1 // pred_check_branch
      %20 = sbr.rel (0) target = $region5
    $region4: #{tpu_custom_call.1} parent=1 // pred_region
      _
    $region5: #{tpu_custom_call.1} parent=1 // pred_fallthru
      _
    // Predicated region
    $region6: #{tpu_custom_call.1} parent=1 // pred_check
      _
    $region7: #{tpu_custom_call.1} parent=1 // pred_check_branch
      %22 = sbr.rel (0) target = $region9
    $region8: #{tpu_custom_call.1} parent=1 // pred_region
      _
    $region9: #{tpu_custom_call.1} parent=1 // pred_fallthru
      _
    // Predicated region
    $region10: #{tpu_custom_call.1} parent=1 // pred_check
      _
    $region11: #{tpu_custom_call.1} parent=1 // pred_check_branch
      %24 = sbr.rel (0) target = $region13
    $region12: #{tpu_custom_call.1} parent=1 // pred_region
      _
    $region13: #{tpu_custom_call.1} parent=1 // pred_fallthru
      _
    // Predicated region
    $region14: #{tpu_custom_call.1} parent=1 // pred_check
      _
    $region15: #{tpu_custom_call.1} parent=1 // pred_check_branch
      %26 = sbr.rel (0) target = $region17
    $region16: #{tpu_custom_call.1} parent=1 // pred_region
      _
    $region17: #{tpu_custom_call.1} parent=1 // pred_fallthru
      _
    // Predicated region
    $region18: #{tpu_custom_call.1} parent=1 // pred_check
      _
    $region19: #{tpu_custom_call.1} parent=1 // pred_check_branch
      %28 = sbr.rel (0) target = $region21
    $region20: #{tpu_custom_call.1} parent=1 // pred_region
      _
    $region21: #{tpu_custom_call.1} parent=1 // pred_fallthru
      _
    // Predicated region
    $region22: #{tpu_custom_call.1} parent=1 // pred_check
      _
    $region23: #{tpu_custom_call.1} parent=1 // pred_check_branch
      %30 = sbr.rel (0) target = $region25
    $region24: #{tpu_custom_call.1} parent=1 // pred_region
      %s32 = ssub.s32 4096, 4096
      %33 = vsyncadd [#allocation3], %s32
      %s34 = sshll.u32 [#allocation2], 4
      %s35 = int_to_ptr.vmem [resolvable:$true] %s34
      %40 = dma.hbm_to_vmem [thread:$0]  %s5, 4096, %s35, [#allocation3], 128, 128, 8
    $region25: #{tpu_custom_call.1} parent=1 // pred_fallthru
      _
    // Predicated region
    $region26: #{tpu_custom_call.1} parent=1 // pred_check
      _
    $region27: #{tpu_custom_call.1} parent=1 // pred_check_branch
      %42 = sbr.rel (0) target = $region29
    $region28: #{tpu_custom_call.1} parent=1 // pred_region
      _
    $region29: #{tpu_custom_call.1} parent=1 // pred_fallthru
      _
    // Predicated region
    $region30: #{tpu_custom_call.1} parent=1 // pred_check
      _
    $region31: #{tpu_custom_call.1} parent=1 // pred_check_branch
      %44 = sbr.rel (0) target = $region33
    $region32: #{tpu_custom_call.1} parent=1 // pred_region
      %s46 = ssub.s32 4096, 4096
      %47 = vsyncadd [#allocation6], %s46
      %s48 = sshll.u32 [#allocation5], 4
      %s49 = int_to_ptr.vmem [resolvable:$true] %s48
      %54 = dma.hbm_to_vmem [thread:$0]  %s7, 4096, %s49, [#allocation6], 128, 128, 8
    $region33: #{tpu_custom_call.1} parent=1 // pred_fallthru
      _
    // Predicated region
    $region34: #{tpu_custom_call.1} parent=1 // pred_check
      _
    $region35: #{tpu_custom_call.1} parent=1 // pred_check_branch
      %56 = sbr.rel (0) target = $region37
    $region36: #{tpu_custom_call.1} parent=1 // pred_region
      _
    $region37: #{tpu_custom_call.1} parent=1 // pred_fallthru
      _
    // Predicated region
    $region38: #{tpu_custom_call.1} parent=1 // pred_check
      _
    $region39: #{tpu_custom_call.1} parent=1 // pred_check_branch
      %58 = sbr.rel (0) target = $region41
    $region40: #{tpu_custom_call.1} parent=1 // pred_region
      %s60 = ssub.s32 2048, 2048
      %61 = vsyncadd [#allocation6], %s60
      %s62 = sshll.u32 [#allocation7], 4
      %s63 = int_to_ptr.vmem [resolvable:$true] %s62
      %68 = dma.hbm_to_vmem [thread:$0]  %s9, 2048, %s63, [#allocation6], 64, 64, 4
    $region41: #{tpu_custom_call.1} parent=1 // pred_fallthru
      _
    // Predicated region
    $region42: #{tpu_custom_call.1} parent=1 // pred_check
      _
    $region43: #{tpu_custom_call.1} parent=1 // pred_check_branch
      %70 = sbr.rel (0) target = $region45
    $region44: #{tpu_custom_call.1} parent=1 // pred_region
      _
    $region45: #{tpu_custom_call.1} parent=1 // pred_fallthru
      _
    // Predicated region
    $region46: #{tpu_custom_call.1} parent=1 // pred_check
      _
    $region47: #{tpu_custom_call.1} parent=1 // pred_check_branch
      %72 = sbr.rel (0) target = $region49
    $region48: #{tpu_custom_call.1} parent=1 // pred_region
      %73 = dma.done [#allocation3], 4096
    $region49: #{tpu_custom_call.1} parent=1 // pred_fallthru
      _
    // Predicated region
    $region50: #{tpu_custom_call.1} parent=1 // pred_check
      _
    $region51: #{tpu_custom_call.1} parent=1 // pred_check_branch
      %75 = sbr.rel (0) target = $region53
    $region52: #{tpu_custom_call.1} parent=1 // pred_region
      %76 = dma.done [#allocation6], 4096
    $region53: #{tpu_custom_call.1} parent=1 // pred_fallthru
      _
    // Predicated region
    $region54: #{tpu_custom_call.1} parent=1 // pred_check
      _
    $region55: #{tpu_custom_call.1} parent=1 // pred_check_branch
      %78 = sbr.rel (0) target = $region57
    $region56: #{tpu_custom_call.1} parent=1 // pred_region
      %79 = dma.done [#allocation6], 2048
    $region57: #{tpu_custom_call.1} parent=1 // pred_fallthru
      _
    %v81 = vld [vmem:[%s0] sm:$0xf]
    %v82 = vld [vmem:[%s0 + $0x4] sm:$0xf]
    %v83 = vld [vmem:[%s0 + $0x8] sm:$0xf]
    %v84 = vld [vmem:[%s0 + $0xc] sm:$0xf]
    %v85 = vld [vmem:[%s0 + $0x10] sm:$0xf]
    %v86 = vld [vmem:[%s0 + $0x14] sm:$0xf]
    %v87 = vld [vmem:[%s1] sm:$0xff]
    %v88 = vld [vmem:[%s1 + $0x8] sm:$0xff]
    %v89 = vld [vmem:[%s1 + $0x10] sm:$0xff]
    %v90 = vld [vmem:[%s1 + $0x18] sm:$0xff]
    %v91 = vld [vmem:[%s1 + $0x20] sm:$0xff]
    %v92 = vld [vmem:[%s1 + $0x28] sm:$0xff]
    %v93 = vld [vmem:[%s2] sm:$0xf]
    %v94 = vld [vmem:[%s3] sm:$0x3]
    %96 = vset.pattern.permute.xlu0 0
    %97 = vperm.xlu0 %96, %v87
    %v98 = vpop.permute.xlu0 %97
    %101 = vset.pattern.permute.xlu0 0
    %102 = vperm.xlu0 %101, %v88
    %v103 = vpop.permute.xlu0 %102
    %106 = vset.pattern.permute.xlu0 0
    %107 = vperm.xlu0 %106, %v89
    %v108 = vpop.permute.xlu0 %107
    %111 = vset.pattern.permute.xlu0 0
    %112 = vperm.xlu0 %111, %v90
    %v113 = vpop.permute.xlu0 %112
    %116 = vset.pattern.permute.xlu0 0
    %117 = vperm.xlu0 %116, %v91
    %v118 = vpop.permute.xlu0 %117
    %121 = vset.pattern.permute.xlu0 0
    %122 = vperm.xlu0 %121, %v92
    %v123 = vpop.permute.xlu0 %122
    %v126 = vlaneseq
    %v127 = vshrl.u32 %v126, 7
    %v128 = vsub.s32 0, %v127
    %v129 = vrot.slane %v94, %v128
    %v130 = vlaneseq
    %v131 = vshrl.u32 %v130, 7
    %v132 = vsub.s32 1, %v131
    %v133 = vrot.slane %v94, %v132
    %v136 = vmul.f32 %v98, %v129
    %v137 = vmul.f32 %v98, %v133
    %v138 = vmul.f32 %v103, %v129
    %v139 = vmul.f32 %v103, %v133
    %v140 = vmul.f32 %v108, %v129
    %v141 = vmul.f32 %v108, %v133
    %v142 = vmul.f32 %v113, %v129
    %v143 = vmul.f32 %v113, %v133
    %v144 = vmul.f32 %v118, %v129
    %v145 = vmul.f32 %v118, %v133
    %v146 = vmul.f32 %v123, %v129
    %v147 = vmul.f32 %v123, %v133
    %v154 = vunpack.c.l.b16 %v81
    %v155 = vunpack.c.l.b16 %v82
    %v156 = vunpack.c.l.b16 %v83
    %v157 = vunpack.c.l.b16 %v84
    %v158 = vunpack.c.l.b16 %v85
    %v159 = vunpack.c.l.b16 %v86
    %v160 = vpack.c.b16 %v155, %v154
    %v161 = vpack.c.b16 %v157, %v156
    %v162 = vpack.c.b16 %v159, %v158
    %v165 = vunpack.c.l.s4 1983009808
    %v166 = vunpack.c.0.s8 %v165
    %v167 = vlaneseq
    %v168 = vshrl.u32 %v167, 7
    %v169 = vsub.s32 %v166, %v168
    %v170 = vrot.slane %v93, %v169
    %v171 = vcombine.high %v170, %v170
    %vm172 = vcmask 31744
    %v174 = vsel %vm172, %v160, 0
    %v177 = vsel %vm172, %v161, 0
    %v180 = vsel %vm172, %v162, 0
    %vm182 = vcmask 1041408
    %v184 = vsel %vm182, %v170, 0
    %v187 = vsel %vm182, %v171, 0
    %189 = vmatprep.subr.bf16.mxu0 0
    %190 = vmatpush1.bf16.msra.mxu0 0
    %191 = vmatprep.subr.bf16.mxu0 0
    %192 = vmatpush1.bf16.msra.mxu0 0
    %193 = vmatprep.subr.bf16.mxu0 0
    %194 = vmatpush1.bf16.msra.mxu0 0
    %195 = vmatprep.subr.bf16.mxu0 0
    %196 = vmatpush1.bf16.msra.mxu0 0
    %197 = vmatprep.subr.bf16.mxu0 0
    %198 = vmatpush1.bf16.msra.mxu0 0
    %199 = vmatprep.subr.bf16.mxu0 0
    %200 = vmatpush1.bf16.msra.mxu0 0
    %201 = vmatprep.subr.bf16.mxu0 0
    %202 = vmatpush1.bf16.msra.mxu0 0
    %203 = vmatprep.subr.bf16.mxu0 %v187
    %204 = vmatpush1.bf16.msra.mxu0 %v184
    %205 = vmatprep.subr.bf16.mxu0 0
    %206 = vmatpush2.bf16.msra.mxu0 0
    %207 = vmatprep.subr.bf16.mxu0 0
    %208 = vmatpush2.bf16.msra.mxu0 0
    %209 = vmatprep.subr.bf16.mxu0 0
    %210 = vmatpush2.bf16.msra.mxu0 0
    %211 = vmatprep.subr.bf16.mxu0 0
    %212 = vmatpush2.bf16.msra.mxu0 0
    %213 = vmatprep.subr.bf16.mxu0 0
    %214 = vmatpush2.bf16.msra.mxu0 0
    %215 = vmatprep.subr.bf16.mxu0 0
    %216 = vmatpush2.bf16.msra.mxu0 0
    %217 = vmatprep.subr.bf16.mxu0 0
    %218 = vmatpush2.bf16.msra.mxu0 0
    %219 = vmatprep.subr.bf16.mxu0 0
    %220 = vmatpush2.bf16.msra.mxu0 0
    %221 = vmatprep.mubr.bf16.mxu0 0
    %222 = vmatmul.mubr.bf16.gmra.mxu0 %v174
    %v223 = vpop.f32.mrf.mxu0
    %v224 = vadd.f32 %v136, %v223
    %v225 = vpop.f32.mrf.mxu0
    %v226 = vadd.f32 %v137, %v225
    %v227 = vpop.f32.mrf.mxu0
    %v228 = vadd.f32 %v138, %v227
    %v229 = vpop.f32.mrf.mxu0
    %v230 = vadd.f32 %v139, %v229
    %231 = vmatprep.mubr.bf16.mxu0 0
    %232 = vmatmul.mubr.bf16.gmra.mxu0 %v177
    %v233 = vpop.f32.mrf.mxu0
    %v234 = vadd.f32 %v140, %v233
    %v235 = vpop.f32.mrf.mxu0
    %v236 = vadd.f32 %v141, %v235
    %v237 = vpop.f32.mrf.mxu0
    %v238 = vadd.f32 %v142, %v237
    %v239 = vpop.f32.mrf.mxu0
    %v240 = vadd.f32 %v143, %v239
    %241 = vmatprep.mubr.bf16.mxu0 0
    %242 = vmatmul.mubr.bf16.gmra.mxu0 %v180
    %v243 = vpop.f32.mrf.mxu0
    %v244 = vadd.f32 %v144, %v243
    %v245 = vpop.f32.mrf.mxu0
    %v246 = vadd.f32 %v145, %v245
    %v247 = vpop.f32.mrf.mxu0
    %v248 = vadd.f32 %v146, %v247
    %v249 = vpop.f32.mrf.mxu0
    %v250 = vadd.f32 %v147, %v249
    %251 = vdwg.mxu0
    %v252 = vld [vmem:[%s4] sm:$0x3]
    %v254 = vlaneseq
    %v255 = vshrl.u32 %v254, 7
    %v256 = vsub.s32 0, %v255
    %v257 = vrot.slane %v252, %v256
    %v258 = vlaneseq
    %v259 = vshrl.u32 %v258, 7
    %v260 = vsub.s32 1, %v259
    %v261 = vrot.slane %v252, %v260
    %v264 = vadd.f32 %v224, %v257
    %v265 = vadd.f32 %v226, %v261
    %v266 = vadd.f32 %v228, %v257
    %v267 = vadd.f32 %v230, %v261
    %v268 = vadd.f32 %v234, %v257
    %v269 = vadd.f32 %v236, %v261
    %v270 = vadd.f32 %v238, %v257
    %v271 = vadd.f32 %v240, %v261
    %v272 = vadd.f32 %v244, %v257
    %v273 = vadd.f32 %v246, %v261
    %v274 = vadd.f32 %v248, %v257
    %v275 = vadd.f32 %v250, %v261
    %v276 = vmax.f32 %v264, 0.0
    %v277 = vmax.f32 %v265, 0.0
    %v278 = vmax.f32 %v266, 0.0
    %v279 = vmax.f32 %v267, 0.0
    %v280 = vmax.f32 %v268, 0.0
    %v281 = vmax.f32 %v269, 0.0
    %v282 = vmax.f32 %v270, 0.0
    %v283 = vmax.f32 %v271, 0.0
    %v284 = vmax.f32 %v272, 0.0
    %v285 = vmax.f32 %v273, 0.0
    %v286 = vmax.f32 %v274, 0.0
    %v287 = vmax.f32 %v275, 0.0
    %v288 = vpack.c.bf16 %v278, %v276
    %v289 = vpack.c.bf16 %v279, %v277
    %v290 = vpack.c.bf16 %v282, %v280
    %v291 = vpack.c.bf16 %v283, %v281
    %v292 = vpack.c.bf16 %v286, %v284
    %v293 = vpack.c.bf16 %v287, %v285
    %v294 = vld [vmem:[#allocation2] sm:$0xff]
    %v295 = vld [vmem:[#allocation2 + $0x8] sm:$0xff]
    %v296 = vld [vmem:[#allocation2 + $0x10] sm:$0xff]
    %v297 = vld [vmem:[#allocation2 + $0x18] sm:$0xff]
    %v298 = vld [vmem:[#allocation2 + $0x20] sm:$0xff]
    %v299 = vld [vmem:[#allocation2 + $0x28] sm:$0xff]
    %v300 = vld [vmem:[#allocation2 + $0x30] sm:$0xff]
    %v301 = vld [vmem:[#allocation2 + $0x38] sm:$0xff]
    %v302 = vld [vmem:[#allocation2 + $0x40] sm:$0xff]
    %v303 = vld [vmem:[#allocation2 + $0x48] sm:$0xff]
    %v304 = vld [vmem:[#allocation2 + $0x50] sm:$0xff]
    %v305 = vld [vmem:[#allocation2 + $0x58] sm:$0xff]
    %v306 = vld [vmem:[#allocation2 + $0x60] sm:$0xff]
    %v307 = vld [vmem:[#allocation2 + $0x68] sm:$0xff]
    %v308 = vld [vmem:[#allocation2 + $0x70] sm:$0xff]
    %v309 = vld [vmem:[#allocation2 + $0x78] sm:$0xff]
    %v310 = vld [vmem:[#allocation2 + $0x80] sm:$0xff]
    %v311 = vld [vmem:[#allocation2 + $0x88] sm:$0xff]
    %v312 = vld [vmem:[#allocation2 + $0x90] sm:$0xff]
    %v313 = vld [vmem:[#allocation2 + $0x98] sm:$0xff]
    %v314 = vld [vmem:[#allocation2 + $0xa0] sm:$0xff]
    %v315 = vld [vmem:[#allocation2 + $0xa8] sm:$0xff]
    %v316 = vld [vmem:[#allocation2 + $0xb0] sm:$0xff]
    %v317 = vld [vmem:[#allocation2 + $0xb8] sm:$0xff]
    %v318 = vld [vmem:[#allocation2 + $0xc0] sm:$0xff]
    %v319 = vld [vmem:[#allocation2 + $0xc8] sm:$0xff]
    %v320 = vld [vmem:[#allocation2 + $0xd0] sm:$0xff]
    %v321 = vld [vmem:[#allocation2 + $0xd8] sm:$0xff]
    %v322 = vld [vmem:[#allocation2 + $0xe0] sm:$0xff]
    %v323 = vld [vmem:[#allocation2 + $0xe8] sm:$0xff]
    %v324 = vld [vmem:[#allocation2 + $0xf0] sm:$0xff]
    %v325 = vld [vmem:[#allocation2 + $0xf8] sm:$0xff]
    %v326 = vld [vmem:[%s6] sm:$0x3]
    %v328 = vlaneseq
    %v329 = vshrl.u32 %v328, 7
    %v330 = vsub.s32 0, %v329
    %v331 = vrot.slane %v326, %v330
    %v332 = vlaneseq
    %v333 = vshrl.u32 %v332, 7
    %v334 = vsub.s32 1, %v333
    %v335 = vrot.slane %v326, %v334
    %v370 = vunpack.c.l.b16 %v294
    %v371 = vunpack.c.h.b16 %v294
    %v372 = vunpack.c.l.b16 %v295
    %v373 = vunpack.c.h.b16 %v295
    %v374 = vunpack.c.l.b16 %v296
    %v375 = vunpack.c.h.b16 %v296
    %v376 = vunpack.c.l.b16 %v297
    %v377 = vunpack.c.h.b16 %v297
    %v378 = vunpack.c.l.b16 %v298
    %v379 = vunpack.c.h.b16 %v298
    %v380 = vunpack.c.l.b16 %v299
    %v381 = vunpack.c.h.b16 %v299
    %v382 = vunpack.c.l.b16 %v300
    %v383 = vunpack.c.h.b16 %v300
    %v384 = vunpack.c.l.b16 %v301
    %v385 = vunpack.c.h.b16 %v301
    %v386 = vunpack.c.l.b16 %v302
    %v387 = vunpack.c.h.b16 %v302
    %v388 = vunpack.c.l.b16 %v303
    %v389 = vunpack.c.h.b16 %v303
    %v390 = vunpack.c.l.b16 %v304
    %v391 = vunpack.c.h.b16 %v304
    %v392 = vunpack.c.l.b16 %v305
    %v393 = vunpack.c.h.b16 %v305
    %v394 = vunpack.c.l.b16 %v306
    %v395 = vunpack.c.h.b16 %v306
    %v396 = vunpack.c.l.b16 %v307
    %v397 = vunpack.c.h.b16 %v307
    %v398 = vunpack.c.l.b16 %v308
    %v399 = vunpack.c.h.b16 %v308
    %v400 = vunpack.c.l.b16 %v309
    %v401 = vunpack.c.h.b16 %v309
    %v402 = vunpack.c.l.b16 %v310
    %v403 = vunpack.c.h.b16 %v310
    %v404 = vunpack.c.l.b16 %v311
    %v405 = vunpack.c.h.b16 %v311
    %v406 = vunpack.c.l.b16 %v312
    %v407 = vunpack.c.h.b16 %v312
    %v408 = vunpack.c.l.b16 %v313
    %v409 = vunpack.c.h.b16 %v313
    %v410 = vunpack.c.l.b16 %v314
    %v411 = vunpack.c.h.b16 %v314
    %v412 = vunpack.c.l.b16 %v315
    %v413 = vunpack.c.h.b16 %v315
    %v414 = vunpack.c.l.b16 %v316
    %v415 = vunpack.c.h.b16 %v316
    %v416 = vunpack.c.l.b16 %v317
    %v417 = vunpack.c.h.b16 %v317
    %v418 = vunpack.c.l.b16 %v318
    %v419 = vunpack.c.h.b16 %v318
    %v420 = vunpack.c.l.b16 %v319
    %v421 = vunpack.c.h.b16 %v319
    %v422 = vunpack.c.l.b16 %v320
    %v423 = vunpack.c.h.b16 %v320
    %v424 = vunpack.c.l.b16 %v321
    %v425 = vunpack.c.h.b16 %v321
    %v426 = vunpack.c.l.b16 %v322
    %v427 = vunpack.c.h.b16 %v322
    %v428 = vunpack.c.l.b16 %v323
    %v429 = vunpack.c.h.b16 %v323
    %v430 = vunpack.c.l.b16 %v324
    %v431 = vunpack.c.h.b16 %v324
    %v432 = vunpack.c.l.b16 %v325
    %v433 = vunpack.c.h.b16 %v325
    %v434 = vpack.c.b16 %v372, %v370
    %v435 = vpack.c.b16 %v373, %v371
    %v436 = vpack.c.b16 %v376, %v374
    %v437 = vpack.c.b16 %v377, %v375
    %v438 = vpack.c.b16 %v380, %v378
    %v439 = vpack.c.b16 %v381, %v379
    %v440 = vpack.c.b16 %v384, %v382
    %v441 = vpack.c.b16 %v385, %v383
    %v442 = vpack.c.b16 %v388, %v386
    %v443 = vpack.c.b16 %v389, %v387
    %v444 = vpack.c.b16 %v392, %v390
    %v445 = vpack.c.b16 %v393, %v391
    %v446 = vpack.c.b16 %v396, %v394
    %v447 = vpack.c.b16 %v397, %v395
    %v448 = vpack.c.b16 %v400, %v398
    %v449 = vpack.c.b16 %v401, %v399
    %v450 = vpack.c.b16 %v404, %v402
    %v451 = vpack.c.b16 %v405, %v403
    %v452 = vpack.c.b16 %v408, %v406
    %v453 = vpack.c.b16 %v409, %v407
    %v454 = vpack.c.b16 %v412, %v410
    %v455 = vpack.c.b16 %v413, %v411
    %v456 = vpack.c.b16 %v416, %v414
    %v457 = vpack.c.b16 %v417, %v415
    %v458 = vpack.c.b16 %v420, %v418
    %v459 = vpack.c.b16 %v421, %v419
    %v460 = vpack.c.b16 %v424, %v422
    %v461 = vpack.c.b16 %v425, %v423
    %v462 = vpack.c.b16 %v428, %v426
    %v463 = vpack.c.b16 %v429, %v427
    %v464 = vpack.c.b16 %v432, %v430
    %v465 = vpack.c.b16 %v433, %v431
    %498 = vmatprep.subr.bf16.mxu0 %v449
    %499 = vmatpush1.bf16.msra.mxu0 %v448
    %500 = vmatprep.subr.bf16.mxu0 %v447
    %501 = vmatpush1.bf16.msra.mxu0 %v446
    %502 = vmatprep.subr.bf16.mxu0 %v445
    %503 = vmatpush1.bf16.msra.mxu0 %v444
    %504 = vmatprep.subr.bf16.mxu0 %v443
    %505 = vmatpush1.bf16.msra.mxu0 %v442
    %506 = vmatprep.subr.bf16.mxu0 %v441
    %507 = vmatpush1.bf16.msra.mxu0 %v440
    %508 = vmatprep.subr.bf16.mxu0 %v439
    %509 = vmatpush1.bf16.msra.mxu0 %v438
    %510 = vmatprep.subr.bf16.mxu0 %v437
    %511 = vmatpush1.bf16.msra.mxu0 %v436
    %512 = vmatprep.subr.bf16.mxu0 %v435
    %513 = vmatpush1.bf16.msra.mxu0 %v434
    %514 = vmatprep.subr.bf16.mxu0 %v465
    %515 = vmatpush2.bf16.msra.mxu0 %v464
    %516 = vmatprep.subr.bf16.mxu0 %v463
    %517 = vmatpush2.bf16.msra.mxu0 %v462
    %518 = vmatprep.subr.bf16.mxu0 %v461
    %519 = vmatpush2.bf16.msra.mxu0 %v460
    %520 = vmatprep.subr.bf16.mxu0 %v459
    %521 = vmatpush2.bf16.msra.mxu0 %v458
    %522 = vmatprep.subr.bf16.mxu0 %v457
    %523 = vmatpush2.bf16.msra.mxu0 %v456
    %524 = vmatprep.subr.bf16.mxu0 %v455
    %525 = vmatpush2.bf16.msra.mxu0 %v454
    %526 = vmatprep.subr.bf16.mxu0 %v453
    %527 = vmatpush2.bf16.msra.mxu0 %v452
    %528 = vmatprep.subr.bf16.mxu0 %v451
    %529 = vmatpush2.bf16.msra.mxu0 %v450
    %530 = vmatprep.mubr.bf16.mxu0 %v289
    %531 = vmatmul.mubr.bf16.gmra.mxu0 %v288
    %v532 = vpop.f32.mrf.mxu0
    %v533 = vadd.f32 %v331, %v532
    %v534 = vpop.f32.mrf.mxu0
    %v535 = vadd.f32 %v335, %v534
    %v536 = vpop.f32.mrf.mxu0
    %v537 = vadd.f32 %v331, %v536
    %v538 = vpop.f32.mrf.mxu0
    %v539 = vadd.f32 %v335, %v538
    %540 = vmatprep.mubr.bf16.mxu0 %v291
    %541 = vmatmul.mubr.bf16.gmra.mxu0 %v290
    %v542 = vpop.f32.mrf.mxu0
    %v543 = vadd.f32 %v331, %v542
    %v544 = vpop.f32.mrf.mxu0
    %v545 = vadd.f32 %v335, %v544
    %v546 = vpop.f32.mrf.mxu0
    %v547 = vadd.f32 %v331, %v546
    %v548 = vpop.f32.mrf.mxu0
    %v549 = vadd.f32 %v335, %v548
    %550 = vmatprep.mubr.bf16.mxu0 %v293
    %551 = vmatmul.mubr.bf16.gmra.mxu0 %v292
    %v552 = vpop.f32.mrf.mxu0
    %v553 = vadd.f32 %v331, %v552
    %v554 = vpop.f32.mrf.mxu0
    %v555 = vadd.f32 %v335, %v554
    %v556 = vpop.f32.mrf.mxu0
    %v557 = vadd.f32 %v331, %v556
    %v558 = vpop.f32.mrf.mxu0
    %v559 = vadd.f32 %v335, %v558
    %560 = vdwg.mxu0
    %v561 = vmax.f32 %v533, 0.0
    %v562 = vmax.f32 %v535, 0.0
    %v563 = vmax.f32 %v537, 0.0
    %v564 = vmax.f32 %v539, 0.0
    %v565 = vmax.f32 %v543, 0.0
    %v566 = vmax.f32 %v545, 0.0
    %v567 = vmax.f32 %v547, 0.0
    %v568 = vmax.f32 %v549, 0.0
    %v569 = vmax.f32 %v553, 0.0
    %v570 = vmax.f32 %v555, 0.0
    %v571 = vmax.f32 %v557, 0.0
    %v572 = vmax.f32 %v559, 0.0
    %v573 = vpack.c.bf16 %v563, %v561
    %v574 = vpack.c.bf16 %v564, %v562
    %v575 = vpack.c.bf16 %v567, %v565
    %v576 = vpack.c.bf16 %v568, %v566
    %v577 = vpack.c.bf16 %v571, %v569
    %v578 = vpack.c.bf16 %v572, %v570
    %v579 = vld [vmem:[#allocation5] sm:$0xff]
    %v580 = vld [vmem:[#allocation5 + $0x8] sm:$0xff]
    %v581 = vld [vmem:[#allocation5 + $0x10] sm:$0xff]
    %v582 = vld [vmem:[#allocation5 + $0x18] sm:$0xff]
    %v583 = vld [vmem:[#allocation5 + $0x20] sm:$0xff]
    %v584 = vld [vmem:[#allocation5 + $0x28] sm:$0xff]
    %v585 = vld [vmem:[#allocation5 + $0x30] sm:$0xff]
    %v586 = vld [vmem:[#allocation5 + $0x38] sm:$0xff]
    %v587 = vld [vmem:[#allocation5 + $0x40] sm:$0xff]
    %v588 = vld [vmem:[#allocation5 + $0x48] sm:$0xff]
    %v589 = vld [vmem:[#allocation5 + $0x50] sm:$0xff]
    %v590 = vld [vmem:[#allocation5 + $0x58] sm:$0xff]
    %v591 = vld [vmem:[#allocation5 + $0x60] sm:$0xff]
    %v592 = vld [vmem:[#allocation5 + $0x68] sm:$0xff]
    %v593 = vld [vmem:[#allocation5 + $0x70] sm:$0xff]
    %v594 = vld [vmem:[#allocation5 + $0x78] sm:$0xff]
    %v595 = vld [vmem:[#allocation5 + $0x80] sm:$0xff]
    %v596 = vld [vmem:[#allocation5 + $0x88] sm:$0xff]
    %v597 = vld [vmem:[#allocation5 + $0x90] sm:$0xff]
    %v598 = vld [vmem:[#allocation5 + $0x98] sm:$0xff]
    %v599 = vld [vmem:[#allocation5 + $0xa0] sm:$0xff]
    %v600 = vld [vmem:[#allocation5 + $0xa8] sm:$0xff]
    %v601 = vld [vmem:[#allocation5 + $0xb0] sm:$0xff]
    %v602 = vld [vmem:[#allocation5 + $0xb8] sm:$0xff]
    %v603 = vld [vmem:[#allocation5 + $0xc0] sm:$0xff]
    %v604 = vld [vmem:[#allocation5 + $0xc8] sm:$0xff]
    %v605 = vld [vmem:[#allocation5 + $0xd0] sm:$0xff]
    %v606 = vld [vmem:[#allocation5 + $0xd8] sm:$0xff]
    %v607 = vld [vmem:[#allocation5 + $0xe0] sm:$0xff]
    %v608 = vld [vmem:[#allocation5 + $0xe8] sm:$0xff]
    %v609 = vld [vmem:[#allocation5 + $0xf0] sm:$0xff]
    %v610 = vld [vmem:[#allocation5 + $0xf8] sm:$0xff]
    %v611 = vld [vmem:[%s8] sm:$0x3]
    %v613 = vlaneseq
    %v614 = vshrl.u32 %v613, 7
    %v615 = vsub.s32 0, %v614
    %v616 = vrot.slane %v611, %v615
    %v617 = vlaneseq
    %v618 = vshrl.u32 %v617, 7
    %v619 = vsub.s32 1, %v618
    %v620 = vrot.slane %v611, %v619
    %v655 = vunpack.c.l.b16 %v579
    %v656 = vunpack.c.h.b16 %v579
    %v657 = vunpack.c.l.b16 %v580
    %v658 = vunpack.c.h.b16 %v580
    %v659 = vunpack.c.l.b16 %v581
    %v660 = vunpack.c.h.b16 %v581
    %v661 = vunpack.c.l.b16 %v582
    %v662 = vunpack.c.h.b16 %v582
    %v663 = vunpack.c.l.b16 %v583
    %v664 = vunpack.c.h.b16 %v583
    %v665 = vunpack.c.l.b16 %v584
    %v666 = vunpack.c.h.b16 %v584
    %v667 = vunpack.c.l.b16 %v585
    %v668 = vunpack.c.h.b16 %v585
    %v669 = vunpack.c.l.b16 %v586
    %v670 = vunpack.c.h.b16 %v586
    %v671 = vunpack.c.l.b16 %v587
    %v672 = vunpack.c.h.b16 %v587
    %v673 = vunpack.c.l.b16 %v588
    %v674 = vunpack.c.h.b16 %v588
    %v675 = vunpack.c.l.b16 %v589
    %v676 = vunpack.c.h.b16 %v589
    %v677 = vunpack.c.l.b16 %v590
    %v678 = vunpack.c.h.b16 %v590
    %v679 = vunpack.c.l.b16 %v591
    %v680 = vunpack.c.h.b16 %v591
    %v681 = vunpack.c.l.b16 %v592
    %v682 = vunpack.c.h.b16 %v592
    %v683 = vunpack.c.l.b16 %v593
    %v684 = vunpack.c.h.b16 %v593
    %v685 = vunpack.c.l.b16 %v594
    %v686 = vunpack.c.h.b16 %v594
    %v687 = vunpack.c.l.b16 %v595
    %v688 = vunpack.c.h.b16 %v595
    %v689 = vunpack.c.l.b16 %v596
    %v690 = vunpack.c.h.b16 %v596
    %v691 = vunpack.c.l.b16 %v597
    %v692 = vunpack.c.h.b16 %v597
    %v693 = vunpack.c.l.b16 %v598
    %v694 = vunpack.c.h.b16 %v598
    %v695 = vunpack.c.l.b16 %v599
    %v696 = vunpack.c.h.b16 %v599
    %v697 = vunpack.c.l.b16 %v600
    %v698 = vunpack.c.h.b16 %v600
    %v699 = vunpack.c.l.b16 %v601
    %v700 = vunpack.c.h.b16 %v601
    %v701 = vunpack.c.l.b16 %v602
    %v702 = vunpack.c.h.b16 %v602
    %v703 = vunpack.c.l.b16 %v603
    %v704 = vunpack.c.h.b16 %v603
    %v705 = vunpack.c.l.b16 %v604
    %v706 = vunpack.c.h.b16 %v604
    %v707 = vunpack.c.l.b16 %v605
    %v708 = vunpack.c.h.b16 %v605
    %v709 = vunpack.c.l.b16 %v606
    %v710 = vunpack.c.h.b16 %v606
    %v711 = vunpack.c.l.b16 %v607
    %v712 = vunpack.c.h.b16 %v607
    %v713 = vunpack.c.l.b16 %v608
    %v714 = vunpack.c.h.b16 %v608
    %v715 = vunpack.c.l.b16 %v609
    %v716 = vunpack.c.h.b16 %v609
    %v717 = vunpack.c.l.b16 %v610
    %v718 = vunpack.c.h.b16 %v610
    %v719 = vpack.c.b16 %v657, %v655
    %v720 = vpack.c.b16 %v658, %v656
    %v721 = vpack.c.b16 %v661, %v659
    %v722 = vpack.c.b16 %v662, %v660
    %v723 = vpack.c.b16 %v665, %v663
    %v724 = vpack.c.b16 %v666, %v664
    %v725 = vpack.c.b16 %v669, %v667
    %v726 = vpack.c.b16 %v670, %v668
    %v727 = vpack.c.b16 %v673, %v671
    %v728 = vpack.c.b16 %v674, %v672
    %v729 = vpack.c.b16 %v677, %v675
    %v730 = vpack.c.b16 %v678, %v676
    %v731 = vpack.c.b16 %v681, %v679
    %v732 = vpack.c.b16 %v682, %v680
    %v733 = vpack.c.b16 %v685, %v683
    %v734 = vpack.c.b16 %v686, %v684
    %v735 = vpack.c.b16 %v689, %v687
    %v736 = vpack.c.b16 %v690, %v688
    %v737 = vpack.c.b16 %v693, %v691
    %v738 = vpack.c.b16 %v694, %v692
    %v739 = vpack.c.b16 %v697, %v695
    %v740 = vpack.c.b16 %v698, %v696
    %v741 = vpack.c.b16 %v701, %v699
    %v742 = vpack.c.b16 %v702, %v700
    %v743 = vpack.c.b16 %v705, %v703
    %v744 = vpack.c.b16 %v706, %v704
    %v745 = vpack.c.b16 %v709, %v707
    %v746 = vpack.c.b16 %v710, %v708
    %v747 = vpack.c.b16 %v713, %v711
    %v748 = vpack.c.b16 %v714, %v712
    %v749 = vpack.c.b16 %v717, %v715
    %v750 = vpack.c.b16 %v718, %v716
    %783 = vmatprep.subr.bf16.mxu0 %v734
    %784 = vmatpush1.bf16.msra.mxu0 %v733
    %785 = vmatprep.subr.bf16.mxu0 %v732
    %786 = vmatpush1.bf16.msra.mxu0 %v731
    %787 = vmatprep.subr.bf16.mxu0 %v730
    %788 = vmatpush1.bf16.msra.mxu0 %v729
    %789 = vmatprep.subr.bf16.mxu0 %v728
    %790 = vmatpush1.bf16.msra.mxu0 %v727
    %791 = vmatprep.subr.bf16.mxu0 %v726
    %792 = vmatpush1.bf16.msra.mxu0 %v725
    %793 = vmatprep.subr.bf16.mxu0 %v724
    %794 = vmatpush1.bf16.msra.mxu0 %v723
    %795 = vmatprep.subr.bf16.mxu0 %v722
    %796 = vmatpush1.bf16.msra.mxu0 %v721
    %797 = vmatprep.subr.bf16.mxu0 %v720
    %798 = vmatpush1.bf16.msra.mxu0 %v719
    %799 = vmatprep.subr.bf16.mxu0 %v750
    %800 = vmatpush2.bf16.msra.mxu0 %v749
    %801 = vmatprep.subr.bf16.mxu0 %v748
    %802 = vmatpush2.bf16.msra.mxu0 %v747
    %803 = vmatprep.subr.bf16.mxu0 %v746
    %804 = vmatpush2.bf16.msra.mxu0 %v745
    %805 = vmatprep.subr.bf16.mxu0 %v744
    %806 = vmatpush2.bf16.msra.mxu0 %v743
    %807 = vmatprep.subr.bf16.mxu0 %v742
    %808 = vmatpush2.bf16.msra.mxu0 %v741
    %809 = vmatprep.subr.bf16.mxu0 %v740
    %810 = vmatpush2.bf16.msra.mxu0 %v739
    %811 = vmatprep.subr.bf16.mxu0 %v738
    %812 = vmatpush2.bf16.msra.mxu0 %v737
    %813 = vmatprep.subr.bf16.mxu0 %v736
    %814 = vmatpush2.bf16.msra.mxu0 %v735
    %815 = vmatprep.mubr.bf16.mxu0 %v574
    %816 = vmatmul.mubr.bf16.gmra.mxu0 %v573
    %v817 = vpop.f32.mrf.mxu0
    %v818 = vadd.f32 %v616, %v817
    %v819 = vpop.f32.mrf.mxu0
    %v820 = vadd.f32 %v620, %v819
    %v821 = vpop.f32.mrf.mxu0
    %v822 = vadd.f32 %v616, %v821
    %v823 = vpop.f32.mrf.mxu0
    %v824 = vadd.f32 %v620, %v823
    %825 = vmatprep.mubr.bf16.mxu0 %v576
    %826 = vmatmul.mubr.bf16.gmra.mxu0 %v575
    %v827 = vpop.f32.mrf.mxu0
    %v828 = vadd.f32 %v616, %v827
    %v829 = vpop.f32.mrf.mxu0
    %v830 = vadd.f32 %v620, %v829
    %v831 = vpop.f32.mrf.mxu0
    %v832 = vadd.f32 %v616, %v831
    %v833 = vpop.f32.mrf.mxu0
    %v834 = vadd.f32 %v620, %v833
    %835 = vmatprep.mubr.bf16.mxu0 %v578
    %836 = vmatmul.mubr.bf16.gmra.mxu0 %v577
    %v837 = vpop.f32.mrf.mxu0
    %v838 = vadd.f32 %v616, %v837
    %v839 = vpop.f32.mrf.mxu0
    %v840 = vadd.f32 %v620, %v839
    %v841 = vpop.f32.mrf.mxu0
    %v842 = vadd.f32 %v616, %v841
    %v843 = vpop.f32.mrf.mxu0
    %v844 = vadd.f32 %v620, %v843
    %845 = vdwg.mxu0
    %v846 = vmax.f32 %v818, 0.0
    %v847 = vmax.f32 %v820, 0.0
    %v848 = vmax.f32 %v822, 0.0
    %v849 = vmax.f32 %v824, 0.0
    %v850 = vmax.f32 %v828, 0.0
    %v851 = vmax.f32 %v830, 0.0
    %v852 = vmax.f32 %v832, 0.0
    %v853 = vmax.f32 %v834, 0.0
    %v854 = vmax.f32 %v838, 0.0
    %v855 = vmax.f32 %v840, 0.0
    %v856 = vmax.f32 %v842, 0.0
    %v857 = vmax.f32 %v844, 0.0
    %v858 = vpack.c.bf16 %v848, %v846
    %v859 = vpack.c.bf16 %v849, %v847
    %v860 = vpack.c.bf16 %v852, %v850
    %v861 = vpack.c.bf16 %v853, %v851
    %v862 = vpack.c.bf16 %v856, %v854
    %v863 = vpack.c.bf16 %v857, %v855
    %v864 = vld [vmem:[#allocation7] sm:$0xf]
    %v865 = vld [vmem:[#allocation7 + $0x4] sm:$0xf]
    %v866 = vld [vmem:[#allocation7 + $0x8] sm:$0xf]
    %v867 = vld [vmem:[#allocation7 + $0xc] sm:$0xf]
    %v868 = vld [vmem:[#allocation7 + $0x10] sm:$0xf]
    %v869 = vld [vmem:[#allocation7 + $0x14] sm:$0xf]
    %v870 = vld [vmem:[#allocation7 + $0x18] sm:$0xf]
    %v871 = vld [vmem:[#allocation7 + $0x1c] sm:$0xf]
    %v872 = vld [vmem:[#allocation7 + $0x20] sm:$0xf]
    %v873 = vld [vmem:[#allocation7 + $0x24] sm:$0xf]
    %v874 = vld [vmem:[#allocation7 + $0x28] sm:$0xf]
    %v875 = vld [vmem:[#allocation7 + $0x2c] sm:$0xf]
    %v876 = vld [vmem:[#allocation7 + $0x30] sm:$0xf]
    %v877 = vld [vmem:[#allocation7 + $0x34] sm:$0xf]
    %v878 = vld [vmem:[#allocation7 + $0x38] sm:$0xf]
    %v879 = vld [vmem:[#allocation7 + $0x3c] sm:$0xf]
    %v880 = vld [vmem:[#allocation7 + $0x40] sm:$0xf]
    %v881 = vld [vmem:[#allocation7 + $0x44] sm:$0xf]
    %v882 = vld [vmem:[#allocation7 + $0x48] sm:$0xf]
    %v883 = vld [vmem:[#allocation7 + $0x4c] sm:$0xf]
    %v884 = vld [vmem:[#allocation7 + $0x50] sm:$0xf]
    %v885 = vld [vmem:[#allocation7 + $0x54] sm:$0xf]
    %v886 = vld [vmem:[#allocation7 + $0x58] sm:$0xf]
    %v887 = vld [vmem:[#allocation7 + $0x5c] sm:$0xf]
    %v888 = vld [vmem:[#allocation7 + $0x60] sm:$0xf]
    %v889 = vld [vmem:[#allocation7 + $0x64] sm:$0xf]
    %v890 = vld [vmem:[#allocation7 + $0x68] sm:$0xf]
    %v891 = vld [vmem:[#allocation7 + $0x6c] sm:$0xf]
    %v892 = vld [vmem:[#allocation7 + $0x70] sm:$0xf]
    %v893 = vld [vmem:[#allocation7 + $0x74] sm:$0xf]
    %v894 = vld [vmem:[#allocation7 + $0x78] sm:$0xf]
    %v895 = vld [vmem:[#allocation7 + $0x7c] sm:$0xf]
    %v896 = vld [vmem:[%s10] sm:$0x1]
    %v898 = vlaneseq
    %v899 = vshrl.u32 %v898, 7
    %v900 = vsub.s32 0, %v899
    %v901 = vrot.slane %v896, %v900
    %v935 = vunpack.c.l.b16 %v864
    %v936 = vunpack.c.l.b16 %v865
    %v937 = vunpack.c.l.b16 %v866
    %v938 = vunpack.c.l.b16 %v867
    %v939 = vunpack.c.l.b16 %v868
    %v940 = vunpack.c.l.b16 %v869
    %v941 = vunpack.c.l.b16 %v870
    %v942 = vunpack.c.l.b16 %v871
    %v943 = vunpack.c.l.b16 %v872
    %v944 = vunpack.c.l.b16 %v873
    %v945 = vunpack.c.l.b16 %v874
    %v946 = vunpack.c.l.b16 %v875
    %v947 = vunpack.c.l.b16 %v876
    %v948 = vunpack.c.l.b16 %v877
    %v949 = vunpack.c.l.b16 %v878
    %v950 = vunpack.c.l.b16 %v879
    %v951 = vunpack.c.l.b16 %v880
    %v952 = vunpack.c.l.b16 %v881
    %v953 = vunpack.c.l.b16 %v882
    %v954 = vunpack.c.l.b16 %v883
    %v955 = vunpack.c.l.b16 %v884
    %v956 = vunpack.c.l.b16 %v885
    %v957 = vunpack.c.l.b16 %v886
    %v958 = vunpack.c.l.b16 %v887
    %v959 = vunpack.c.l.b16 %v888
    %v960 = vunpack.c.l.b16 %v889
    %v961 = vunpack.c.l.b16 %v890
    %v962 = vunpack.c.l.b16 %v891
    %v963 = vunpack.c.l.b16 %v892
    %v964 = vunpack.c.l.b16 %v893
    %v965 = vunpack.c.l.b16 %v894
    %v966 = vunpack.c.l.b16 %v895
    %v967 = vpack.c.b16 %v936, %v935
    %v968 = vpack.c.b16 %v938, %v937
    %v969 = vpack.c.b16 %v940, %v939
    %v970 = vpack.c.b16 %v942, %v941
    %v971 = vpack.c.b16 %v944, %v943
    %v972 = vpack.c.b16 %v946, %v945
    %v973 = vpack.c.b16 %v948, %v947
    %v974 = vpack.c.b16 %v950, %v949
    %v975 = vpack.c.b16 %v952, %v951
    %v976 = vpack.c.b16 %v954, %v953
    %v977 = vpack.c.b16 %v956, %v955
    %v978 = vpack.c.b16 %v958, %v957
    %v979 = vpack.c.b16 %v960, %v959
    %v980 = vpack.c.b16 %v962, %v961
    %v981 = vpack.c.b16 %v964, %v963
    %v982 = vpack.c.b16 %v966, %v965
    %999 = vmatprep.subr.bf16.mxu0 0
    %1000 = vmatpush1.bf16.msra.mxu0 %v974
    %1001 = vmatprep.subr.bf16.mxu0 0
    %1002 = vmatpush1.bf16.msra.mxu0 %v973
    %1003 = vmatprep.subr.bf16.mxu0 0
    %1004 = vmatpush1.bf16.msra.mxu0 %v972
    %1005 = vmatprep.subr.bf16.mxu0 0
    %1006 = vmatpush1.bf16.msra.mxu0 %v971
    %1007 = vmatprep.subr.bf16.mxu0 0
    %1008 = vmatpush1.bf16.msra.mxu0 %v970
    %1009 = vmatprep.subr.bf16.mxu0 0
    %1010 = vmatpush1.bf16.msra.mxu0 %v969
    %1011 = vmatprep.subr.bf16.mxu0 0
    %1012 = vmatpush1.bf16.msra.mxu0 %v968
    %1013 = vmatprep.subr.bf16.mxu0 0
    %1014 = vmatpush1.bf16.msra.mxu0 %v967
    %1015 = vmatprep.subr.bf16.mxu0 0
    %1016 = vmatpush2.bf16.msra.mxu0 %v982
    %1017 = vmatprep.subr.bf16.mxu0 0
    %1018 = vmatpush2.bf16.msra.mxu0 %v981
    %1019 = vmatprep.subr.bf16.mxu0 0
    %1020 = vmatpush2.bf16.msra.mxu0 %v980
    %1021 = vmatprep.subr.bf16.mxu0 0
    %1022 = vmatpush2.bf16.msra.mxu0 %v979
    %1023 = vmatprep.subr.bf16.mxu0 0
    %1024 = vmatpush2.bf16.msra.mxu0 %v978
    %1025 = vmatprep.subr.bf16.mxu0 0
    %1026 = vmatpush2.bf16.msra.mxu0 %v977
    %1027 = vmatprep.subr.bf16.mxu0 0
    %1028 = vmatpush2.bf16.msra.mxu0 %v976
    %1029 = vmatprep.subr.bf16.mxu0 0
    %1030 = vmatpush2.bf16.msra.mxu0 %v975
    %1031 = vmatprep.mubr.bf16.mxu0 %v859
    %1032 = vmatmul.mubr.bf16.gmra.mxu0 %v858
    %v1033 = vpop.f32.mrf.mxu0
    %v1034 = vadd.f32 %v901, %v1033
    %v1035 = vpop.f32.mrf.mxu0
    %v1036 = vpop.f32.mrf.mxu0
    %v1037 = vadd.f32 %v901, %v1036
    %v1038 = vpop.f32.mrf.mxu0
    %1039 = vmatprep.mubr.bf16.mxu0 %v861
    %1040 = vmatmul.mubr.bf16.gmra.mxu0 %v860
    %v1041 = vpop.f32.mrf.mxu0
    %v1042 = vadd.f32 %v901, %v1041
    %v1043 = vpop.f32.mrf.mxu0
    %v1044 = vpop.f32.mrf.mxu0
    %v1045 = vadd.f32 %v901, %v1044
    %v1046 = vpop.f32.mrf.mxu0
    %1047 = vmatprep.mubr.bf16.mxu0 %v863
    %1048 = vmatmul.mubr.bf16.gmra.mxu0 %v862
    %v1049 = vpop.f32.mrf.mxu0
    %v1050 = vadd.f32 %v901, %v1049
    %v1051 = vpop.f32.mrf.mxu0
    %v1052 = vpop.f32.mrf.mxu0
    %v1053 = vadd.f32 %v901, %v1052
    %v1054 = vpop.f32.mrf.mxu0
    %1055 = vdwg.mxu0
    %1056 = vst [vmem:[#allocation8] sm:$0xff] %v1034
    %1057 = vst [vmem:[#allocation8 + $0x8] sm:$0xff] %v1037
    %1058 = vst [vmem:[#allocation8 + $0x10] sm:$0xff] %v1042
    %1059 = vst [vmem:[#allocation8 + $0x18] sm:$0xff] %v1045
    %1060 = vst [vmem:[#allocation8 + $0x20] sm:$0xff] %v1050
    %1061 = vst [vmem:[#allocation8 + $0x28] sm:$0xff] %v1053
    // Predicated region
    $region58: #{tpu_custom_call.1} parent=1 // pred_check
      _
    $region59: #{tpu_custom_call.1} parent=1 // pred_check_branch
      %1063 = sbr.rel (0) target = $region61
    $region60: #{tpu_custom_call.1} parent=1 // pred_region
      %s1065 = ssub.s32 768, 768
      %1066 = vsyncadd [#allocation4], %s1065
      %s1067 = sshll.u32 [#allocation8], 4
      %s1068 = int_to_ptr.vmem [resolvable:$true] %s1067
      %1073 = dma.vmem_to_hbm [thread:$0]  %s1068, 768, %s11, [#allocation4], 128, 128, 8
    $region61: #{tpu_custom_call.1} parent=1 // pred_fallthru
      _
    // Predicated region
    $region62: #{tpu_custom_call.1} parent=1 // pred_check
      _
    $region63: #{tpu_custom_call.1} parent=1 // pred_check_branch
      %1075 = sbr.rel (0) target = $region65
    $region64: #{tpu_custom_call.1} parent=1 // pred_region
      %1076 = dma.done [#allocation4], 768
    $region65: #{tpu_custom_call.1} parent=1 // pred_fallthru
      _
    %1077 = vsyncpa [#allocation3], 1
    %1078 = vsyncpa [#allocation6], 1
    %1079 = vsyncpa [#allocation4], 1

</llo_original>
